<compile_context>
chip_gen: v7x
topology: tpu7x:2x2x1
jax: 0.10.0
libtpu: 0.0.40
codegen_flags: <defaults>
</compile_context>

<pallas_src>
import functools

import jax
import jax.numpy as jnp
from jax import lax
from jax.experimental import pallas as pl
from jax.experimental.pallas import tpu as pltpu

_NEG_BIG = -1e30          # masking sentinel (avoids inf - inf NaNs)
_EPS_SQ = 1e-24           # (torch F.normalize eps = 1e-12) squared


def _contrastive_lse_kernel(img_i_ref, txt_i_ref, img_j_ref, txt_j_ref,
                            out_ref,
                            m_img_ref, l_img_ref, m_txt_ref, l_txt_ref,
                            *, b_valid, block, need_mask):
    """Accumulates per-row logsumexp of logits (img rows) and logits.T (txt rows).

    Tiles are computed "transposed": s[c, r] = col_tile[c] . row_tile[r], so the
    per-row reduction is over axis 0 and every accumulator stays lane-oriented.
    """
    j = pl.program_id(1)
    last_j = pl.num_programs(1) - 1

    @pl.when(j == 0)
    def _init():
        m_img_ref[...] = jnp.full_like(m_img_ref, _NEG_BIG)
        l_img_ref[...] = jnp.zeros_like(l_img_ref)
        m_txt_ref[...] = jnp.full_like(m_txt_ref, _NEG_BIG)
        l_txt_ref[...] = jnp.zeros_like(l_txt_ref)

    # f32 inputs are the validation path: force a full-precision MXU matmul.
    precision = (lax.Precision.HIGHEST
                 if img_i_ref.dtype == jnp.float32 else None)
    dn = (((1,), (1,)), ((), ()))     # contract the feature dim of both operands

    if need_mask:
        # Global column index of the logits (= axis-0 index of the transposed tile).
        col_ids = j * block + lax.broadcasted_iota(jnp.int32, (block, 1), 0)
        col_valid = col_ids < b_valid
    else:
        col_valid = None

    def _online_lse(s, m_ref, l_ref):
        if col_valid is not None:
            s = jnp.where(col_valid, s, _NEG_BIG)
        m_old = m_ref[...]
        m_new = jnp.maximum(m_old, jnp.max(s, axis=0, keepdims=True))
        p = jnp.exp(s - m_new)
        l_ref[...] = jnp.exp(m_old - m_new) * l_ref[...] + jnp.sum(
            p, axis=0, keepdims=True)
        m_ref[...] = m_new

    # loss_img: s_img[c, r] = logits[i*block + r, j*block + c]
    s_img = lax.dot_general(txt_j_ref[...], img_i_ref[...], dn,
                            precision=precision,
                            preferred_element_type=jnp.float32)
    _online_lse(s_img, m_img_ref, l_img_ref)

    # loss_txt: s_txt[c, r] = logits.T[i*block + r, j*block + c]
    # TODO(synk): exploit logits symmetry (one matmul + on-chip transpose per tile)
    # once the kernel is MXU-bound on the target generation.
    s_txt = lax.dot_general(img_j_ref[...], txt_i_ref[...], dn,
                            precision=precision,
                            preferred_element_type=jnp.float32)
    _online_lse(s_txt, m_txt_ref, l_txt_ref)

    @pl.when(j == last_j)
    def _finalize():
        lse_sum = (m_img_ref[...] + jnp.log(l_img_ref[...])
                   + m_txt_ref[...] + jnp.log(l_txt_ref[...]))      # (1, block)
        # Lane-dense, fully unmasked (8, block) store; wrapper reads sublane 0.
        out_ref[...] = jnp.broadcast_to(lse_sum.reshape(1, 1, block),
                                        (1, 8, block))


def _default_block(b):
    if b <= 128:
        return 8 * pl.cdiv(b, 8)        # single tiny tile, minimal sublane padding
    if b <= 512:
        return 128 * pl.cdiv(b, 128)    # single 128-aligned tile
    return 512                          # streamed 512-row tiles (128-aligned)


def contrastive_loss(logits_per_image, logits_per_text, temperature=0.07,
                     *, matmul_dtype=jnp.bfloat16, block_b=None):
    """Pallas implementation of ContrastiveLoss.forward. Returns a scalar f32."""
    assert logits_per_image.shape == logits_per_text.shape
    assert logits_per_image.ndim == 2
    b, d = logits_per_image.shape

    block = int(block_b) if block_b is not None else _default_block(b)
    assert block % 8 == 0, "batch tile must be a multiple of 8 sublanes"
    num_tiles = pl.cdiv(b, block)
    b_pad = num_tiles * block

    # ---- Prologue (plain XLA, one mem-bound pass): L2-normalize, fold in
    # 1/sqrt(T), cast to the MXU dtype, and compute the diagonal (label) logit. ----
    inv_sqrt_t = float(temperature) ** -0.5

    def _prep(x):
        x = x.astype(jnp.float32)
        ss = jnp.sum(x * x, axis=1, keepdims=True)
        return (x * (lax.rsqrt(jnp.maximum(ss, _EPS_SQ)) * inv_sqrt_t)
                ).astype(matmul_dtype)

    img_n = _prep(logits_per_image)
    txt_n = _prep(logits_per_text)
    # Label logit per row, computed from the same cast values the MXU consumes.
    diag = jnp.sum(img_n.astype(jnp.float32) * txt_n.astype(jnp.float32), axis=1)

    if b_pad != b:   # ragged edge: zero-pad rows (finite; padded cols masked in-kernel)
        img_n = jnp.pad(img_n, ((0, b_pad - b), (0, 0)))
        txt_n = jnp.pad(txt_n, ((0, b_pad - b), (0, 0)))

    # ---- Computed VMEM budget (no blanket 48 MiB; v7x only has 64 MiB physical). ----
    itemsize = jnp.dtype(matmul_dtype).itemsize
    vmem_bytes = int(
        2 * 4 * block * d * itemsize    # double-buffered i/j input tiles
        + 2 * 8 * block * 4             # double-buffered (1, 8, block) output
        + 4 * 8 * block * 4             # m/l accumulators (sublane-padded)
        + 6 * block * block * 4         # s / p / mask f32 temporaries
        + (4 << 20))                    # headroom for compiler-internal scratch
    vmem_bytes = max(vmem_bytes, 16 << 20)

    kernel = functools.partial(_contrastive_lse_kernel, b_valid=b, block=block,
                               need_mask=(b_pad != b))

    row_spec = pl.BlockSpec((block, d), lambda i, j: (i, 0))   # resident across j
    col_spec = pl.BlockSpec((block, d), lambda i, j: (j, 0))   # streamed over j
    # TODO(synk): add pipeline_mode=pl.Buffered(3) on col_spec if profiling shows
    # exposed DMA at tile boundaries (most likely on v5e).

    lse = pl.pallas_call(
        kernel,
        out_shape=jax.ShapeDtypeStruct((num_tiles, 8, block), jnp.float32),
        grid_spec=pltpu.PrefetchScalarGridSpec(
            num_scalar_prefetch=0,
            grid=(num_tiles, num_tiles),
            in_specs=[row_spec, row_spec, col_spec, col_spec],
            out_specs=pl.BlockSpec((1, 8, block), lambda i, j: (i, 0, 0)),
            scratch_shapes=[pltpu.VMEM((1, block), jnp.float32)] * 4,
        ),
        compiler_params=pltpu.CompilerParams(
            dimension_semantics=("parallel", "arbitrary"),
            vmem_limit_bytes=vmem_bytes,
        ),
    )(img_n, txt_n, img_n, txt_n)

    lse_sum = lse[:, 0, :].reshape(b_pad)[:b]     # per-row lse_img + lse_txt
    per_row = lse_sum - 2.0 * diag                # per-row CE_img + CE_txt
    return jnp.sum(per_row) / (2.0 * b)           # = (loss_img + loss_txt) / 2


def _reference_loss(img, txt, temperature=0.07):
    """Pure-JAX reference mirroring the PyTorch module."""
    eps = 1e-12
    img_n = img / jnp.maximum(jnp.linalg.norm(img, axis=1, keepdims=True), eps)
    txt_n = txt / jnp.maximum(jnp.linalg.norm(txt, axis=1, keepdims=True), eps)
    logits = jnp.dot(img_n, txt_n.T, precision=lax.Precision.HIGHEST) / temperature
    n = logits.shape[0]
    idx = jnp.arange(n)

    def ce(lg):
        return jnp.mean(jax.nn.logsumexp(lg, axis=1) - lg[idx, idx])

    return (ce(logits) + ce(logits.T)) / 2.0


if __name__ == "__main__":
    key = jax.random.PRNGKey(0)
    k1, k2, k3, k4, k5, k6 = jax.random.split(key, 6)

    # Case 1: small single-tile shapes implied by the module forward (batch, dim).
    B, D = 8, 32
    img = jax.random.normal(k1, (B, D), dtype=jnp.float32)
    txt = jax.random.normal(k2, (B, D), dtype=jnp.float32)
    ref = _reference_loss(img, txt, 0.07)

    loss_f32 = jax.block_until_ready(
        contrastive_loss(img, txt, 0.07, matmul_dtype=jnp.float32))
    assert jnp.allclose(loss_f32, ref, rtol=1e-3, atol=1e-3), (loss_f32, ref)

    loss_bf16 = jax.block_until_ready(contrastive_loss(img, txt, 0.07))
    assert jnp.allclose(loss_bf16, ref, rtol=5e-2, atol=1e-1), (loss_bf16, ref)

    # Case 2: ragged batch + multi-tile grid with in-kernel column masking
    # (B=20 padded to 24, 3x3 grid of 8-row tiles).
    B2 = 20
    img2 = jax.random.normal(k3, (B2, D), dtype=jnp.float32)
    txt2 = jax.random.normal(k4, (B2, D), dtype=jnp.float32)
    ref2 = _reference_loss(img2, txt2, 0.07)
    loss2 = jax.block_until_ready(
        contrastive_loss(img2, txt2, 0.07, matmul_dtype=jnp.float32, block_b=8))
    assert jnp.allclose(loss2, ref2, rtol=1e-3, atol=1e-3), (loss2, ref2)

    # Case 3: multi-tile streamed bf16 path with 128-aligned tiles (2x2 grid).
    B3, D3 = 256, 64
    img3 = jax.random.normal(k5, (B3, D3), dtype=jnp.float32)
    txt3 = jax.random.normal(k6, (B3, D3), dtype=jnp.float32)
    ref3 = _reference_loss(img3, txt3, 0.07)
    loss3 = jax.block_until_ready(contrastive_loss(img3, txt3, 0.07, block_b=128))
    assert jnp.allclose(loss3, ref3, rtol=5e-2, atol=1e-1), (loss3, ref3)

    print("KERNEL_OK")
</pallas_src>

<mosaic_0001>
module attributes {stable_mosaic.version = 11 : i64} {
  func.func @_contrastive_lse_kernel(%arg0: i32, %arg1: i32, %arg2: memref<8x32xf32, #tpu.memory_space<vmem>>, %arg3: memref<8x32xf32, #tpu.memory_space<vmem>>, %arg4: memref<8x32xf32, #tpu.memory_space<vmem>>, %arg5: memref<8x32xf32, #tpu.memory_space<vmem>>, %arg6: memref<1x8x8xf32, #tpu.memory_space<vmem>>, %arg7: memref<1x8xf32, #tpu.memory_space<vmem>>, %arg8: memref<1x8xf32, #tpu.memory_space<vmem>>, %arg9: memref<1x8xf32, #tpu.memory_space<vmem>>, %arg10: memref<1x8xf32, #tpu.memory_space<vmem>>) attributes {dimension_semantics = [#tpu.dimension_semantics<parallel>, #tpu.dimension_semantics<arbitrary>], iteration_bounds = array<i64: 1, 1>, scalar_prefetch = 0 : i64, scratch_operands = 4 : i64, tpu.core_type = #tpu.core_type<tc>, window_params = [{transform_indices = @transform_0, window_bounds = array<i64: 8, 32>}, {transform_indices = @transform_1, window_bounds = array<i64: 8, 32>}, {transform_indices = @transform_2, window_bounds = array<i64: 8, 32>}, {transform_indices = @transform_3, window_bounds = array<i64: 8, 32>}, {transform_indices = @transform_4, window_bounds = array<i64: 1, 8, 8>}]} {
    %c0_i32 = arith.constant 0 : i32
    %0 = arith.cmpi eq, %arg1, %c0_i32 : i32
    %1 = arith.extui %0 : i1 to i32
    %c0_i32_0 = arith.constant 0 : i32
    %2 = arith.cmpi ne, %1, %c0_i32_0 : i32
    scf.if %2 {
      %cst_31 = arith.constant -1.000000e+30 : f32
      %44 = vector.broadcast %cst_31 : f32 to vector<1x8xf32>
      %c0_32 = arith.constant 0 : index
      %c0_33 = arith.constant 0 : index
      %45 = vector.load %arg7[%c0_32, %c0_33] : memref<1x8xf32, #tpu.memory_space<vmem>>, vector<1x8xf32>
      tpu.vector_store %arg7[%c0_32, %c0_33], %44 {strides = array<i32>} : memref<1x8xf32, #tpu.memory_space<vmem>>, vector<1x8xf32>,
      %cst_34 = arith.constant 0.000000e+00 : f32
      %46 = vector.broadcast %cst_34 : f32 to vector<1x8xf32>
      %c0_35 = arith.constant 0 : index
      %c0_36 = arith.constant 0 : index
      %47 = vector.load %arg8[%c0_35, %c0_36] : memref<1x8xf32, #tpu.memory_space<vmem>>, vector<1x8xf32>
      tpu.vector_store %arg8[%c0_35, %c0_36], %46 {strides = array<i32>} : memref<1x8xf32, #tpu.memory_space<vmem>>, vector<1x8xf32>,
      %cst_37 = arith.constant -1.000000e+30 : f32
      %48 = vector.broadcast %cst_37 : f32 to vector<1x8xf32>
      %c0_38 = arith.constant 0 : index
      %c0_39 = arith.constant 0 : index
      %49 = vector.load %arg9[%c0_38, %c0_39] : memref<1x8xf32, #tpu.memory_space<vmem>>, vector<1x8xf32>
      tpu.vector_store %arg9[%c0_38, %c0_39], %48 {strides = array<i32>} : memref<1x8xf32, #tpu.memory_space<vmem>>, vector<1x8xf32>,
      %cst_40 = arith.constant 0.000000e+00 : f32
      %50 = vector.broadcast %cst_40 : f32 to vector<1x8xf32>
      %c0_41 = arith.constant 0 : index
      %c0_42 = arith.constant 0 : index
      %51 = vector.load %arg10[%c0_41, %c0_42] : memref<1x8xf32, #tpu.memory_space<vmem>>, vector<1x8xf32>
      tpu.vector_store %arg10[%c0_41, %c0_42], %50 {strides = array<i32>} : memref<1x8xf32, #tpu.memory_space<vmem>>, vector<1x8xf32>,
    } else {
    }
    %c0 = arith.constant 0 : index
    %c0_1 = arith.constant 0 : index
    %3 = vector.load %arg5[%c0, %c0_1] : memref<8x32xf32, #tpu.memory_space<vmem>>, vector<8x32xf32>
    %c0_2 = arith.constant 0 : index
    %c0_3 = arith.constant 0 : index
    %4 = vector.load %arg2[%c0_2, %c0_3] : memref<8x32xf32, #tpu.memory_space<vmem>>, vector<8x32xf32>
    %cst = arith.constant dense<0.000000e+00> : vector<8x8xf32>
    %5 = tpu.matmul %3, %4, %cst {dimension_numbers = #tpu.dot_dimension_numbers<[1], [1], [0], [0], [0, 0, 1, 0], [], []>, precision = #tpu.contract_precision<fp32>} : vector<8x32xf32>, vector<8x32xf32>, vector<8x8xf32> -> vector<8x8xf32>
    %c0_4 = arith.constant 0 : index
    %c0_5 = arith.constant 0 : index
    %6 = vector.load %arg7[%c0_4, %c0_5] : memref<1x8xf32, #tpu.memory_space<vmem>>, vector<1x8xf32>
    %cst_6 = arith.constant dense<0xFF800000> : vector<8xf32>
    %7 = vector.multi_reduction <maximumf>, %5, %cst_6 [0] : vector<8x8xf32> to vector<8xf32>
    %8 = vector.shape_cast %7 : vector<8xf32> to vector<1x8xf32>
    %9 = arith.maximumf %6, %8 : vector<1x8xf32>
    %10 = vector.broadcast %9 : vector<1x8xf32> to vector<8x8xf32>
    %11 = arith.subf %5, %10 : vector<8x8xf32>
    %12 = math.exp %11 : vector<8x8xf32>
    %13 = arith.subf %6, %9 : vector<1x8xf32>
    %14 = math.exp %13 : vector<1x8xf32>
    %c0_7 = arith.constant 0 : index
    %c0_8 = arith.constant 0 : index
    %15 = vector.load %arg8[%c0_7, %c0_8] : memref<1x8xf32, #tpu.memory_space<vmem>>, vector<1x8xf32>
    %16 = arith.mulf %14, %15 : vector<1x8xf32>
    %cst_9 = arith.constant dense<0.000000e+00> : vector<8xf32>
    %17 = vector.multi_reduction <add>, %12, %cst_9 [0] : vector<8x8xf32> to vector<8xf32>
    %18 = vector.shape_cast %17 : vector<8xf32> to vector<1x8xf32>
    %19 = arith.addf %16, %18 : vector<1x8xf32>
    %c0_10 = arith.constant 0 : index
    %c0_11 = arith.constant 0 : index
    %20 = vector.load %arg8[%c0_10, %c0_11] : memref<1x8xf32, #tpu.memory_space<vmem>>, vector<1x8xf32>
    tpu.vector_store %arg8[%c0_10, %c0_11], %19 {strides = array<i32>} : memref<1x8xf32, #tpu.memory_space<vmem>>, vector<1x8xf32>,
    %c0_12 = arith.constant 0 : index
    %c0_13 = arith.constant 0 : index
    %21 = vector.load %arg7[%c0_12, %c0_13] : memref<1x8xf32, #tpu.memory_space<vmem>>, vector<1x8xf32>
    tpu.vector_store %arg7[%c0_12, %c0_13], %9 {strides = array<i32>} : memref<1x8xf32, #tpu.memory_space<vmem>>, vector<1x8xf32>,
    %c0_14 = arith.constant 0 : index
    %c0_15 = arith.constant 0 : index
    %22 = vector.load %arg4[%c0_14, %c0_15] : memref<8x32xf32, #tpu.memory_space<vmem>>, vector<8x32xf32>
    %c0_16 = arith.constant 0 : index
    %c0_17 = arith.constant 0 : index
    %23 = vector.load %arg3[%c0_16, %c0_17] : memref<8x32xf32, #tpu.memory_space<vmem>>, vector<8x32xf32>
    %cst_18 = arith.constant dense<0.000000e+00> : vector<8x8xf32>
    %24 = tpu.matmul %22, %23, %cst_18 {dimension_numbers = #tpu.dot_dimension_numbers<[1], [1], [0], [0], [0, 0, 1, 0], [], []>, precision = #tpu.contract_precision<fp32>} : vector<8x32xf32>, vector<8x32xf32>, vector<8x8xf32> -> vector<8x8xf32>
    %c0_19 = arith.constant 0 : index
    %c0_20 = arith.constant 0 : index
    %25 = vector.load %arg9[%c0_19, %c0_20] : memref<1x8xf32, #tpu.memory_space<vmem>>, vector<1x8xf32>
    %cst_21 = arith.constant dense<0xFF800000> : vector<8xf32>
    %26 = vector.multi_reduction <maximumf>, %24, %cst_21 [0] : vector<8x8xf32> to vector<8xf32>
    %27 = vector.shape_cast %26 : vector<8xf32> to vector<1x8xf32>
    %28 = arith.maximumf %25, %27 : vector<1x8xf32>
    %29 = vector.broadcast %28 : vector<1x8xf32> to vector<8x8xf32>
    %30 = arith.subf %24, %29 : vector<8x8xf32>
    %31 = math.exp %30 : vector<8x8xf32>
    %32 = arith.subf %25, %28 : vector<1x8xf32>
    %33 = math.exp %32 : vector<1x8xf32>
    %c0_22 = arith.constant 0 : index
    %c0_23 = arith.constant 0 : index
    %34 = vector.load %arg10[%c0_22, %c0_23] : memref<1x8xf32, #tpu.memory_space<vmem>>, vector<1x8xf32>
    %35 = arith.mulf %33, %34 : vector<1x8xf32>
    %cst_24 = arith.constant dense<0.000000e+00> : vector<8xf32>
    %36 = vector.multi_reduction <add>, %31, %cst_24 [0] : vector<8x8xf32> to vector<8xf32>
    %37 = vector.shape_cast %36 : vector<8xf32> to vector<1x8xf32>
    %38 = arith.addf %35, %37 : vector<1x8xf32>
    %c0_25 = arith.constant 0 : index
    %c0_26 = arith.constant 0 : index
    %39 = vector.load %arg10[%c0_25, %c0_26] : memref<1x8xf32, #tpu.memory_space<vmem>>, vector<1x8xf32>
    tpu.vector_store %arg10[%c0_25, %c0_26], %38 {strides = array<i32>} : memref<1x8xf32, #tpu.memory_space<vmem>>, vector<1x8xf32>,
    %c0_27 = arith.constant 0 : index
    %c0_28 = arith.constant 0 : index
    %40 = vector.load %arg9[%c0_27, %c0_28] : memref<1x8xf32, #tpu.memory_space<vmem>>, vector<1x8xf32>
    tpu.vector_store %arg9[%c0_27, %c0_28], %28 {strides = array<i32>} : memref<1x8xf32, #tpu.memory_space<vmem>>, vector<1x8xf32>,
    %c0_i32_29 = arith.constant 0 : i32
    %41 = arith.cmpi eq, %arg1, %c0_i32_29 : i32
    %42 = arith.extui %41 : i1 to i32
    %c0_i32_30 = arith.constant 0 : i32
    %43 = arith.cmpi ne, %42, %c0_i32_30 : i32
    scf.if %43 {
      %c0_31 = arith.constant 0 : index
      %c0_32 = arith.constant 0 : index
      %44 = vector.load %arg7[%c0_31, %c0_32] : memref<1x8xf32, #tpu.memory_space<vmem>>, vector<1x8xf32>
      %c0_33 = arith.constant 0 : index
      %c0_34 = arith.constant 0 : index
      %45 = vector.load %arg8[%c0_33, %c0_34] : memref<1x8xf32, #tpu.memory_space<vmem>>, vector<1x8xf32>
      %46 = math.log %45 : vector<1x8xf32>
      %47 = arith.addf %44, %46 : vector<1x8xf32>
      %c0_35 = arith.constant 0 : index
      %c0_36 = arith.constant 0 : index
      %48 = vector.load %arg9[%c0_35, %c0_36] : memref<1x8xf32, #tpu.memory_space<vmem>>, vector<1x8xf32>
      %49 = arith.addf %47, %48 : vector<1x8xf32>
      %c0_37 = arith.constant 0 : index
      %c0_38 = arith.constant 0 : index
      %50 = vector.load %arg10[%c0_37, %c0_38] : memref<1x8xf32, #tpu.memory_space<vmem>>, vector<1x8xf32>
      %51 = math.log %50 : vector<1x8xf32>
      %52 = arith.addf %49, %51 : vector<1x8xf32>
      %53 = vector.shape_cast %52 : vector<1x8xf32> to vector<1x1x8xf32>
      %54 = vector.shape_cast %53 : vector<1x1x8xf32> to vector<1x1x8xf32>
      %55 = vector.broadcast %54 : vector<1x1x8xf32> to vector<1x8x8xf32>
      %c0_39 = arith.constant 0 : index
      %c0_40 = arith.constant 0 : index
      %c0_41 = arith.constant 0 : index
      %56 = vector.load %arg6[%c0_39, %c0_40, %c0_41] : memref<1x8x8xf32, #tpu.memory_space<vmem>>, vector<1x8x8xf32>
      tpu.vector_store %arg6[%c0_39, %c0_40, %c0_41], %55 {strides = array<i32>} : memref<1x8x8xf32, #tpu.memory_space<vmem>>, vector<1x8x8xf32>,
    } else {
    }
    return
  }
  func.func @transform_0(%arg0: i32, %arg1: i32) -> (i32, i32) {
    %c0_i32 = arith.constant 0 : i32
    %c0_i32_0 = arith.constant 0 : i32
    return %arg0, %c0_i32 : i32, i32
  }
  func.func @transform_1(%arg0: i32, %arg1: i32) -> (i32, i32) {
    %c0_i32 = arith.constant 0 : i32
    %c0_i32_0 = arith.constant 0 : i32
    return %arg0, %c0_i32 : i32, i32
  }
  func.func @transform_2(%arg0: i32, %arg1: i32) -> (i32, i32) {
    %c0_i32 = arith.constant 0 : i32
    %c0_i32_0 = arith.constant 0 : i32
    return %arg1, %c0_i32 : i32, i32
  }
  func.func @transform_3(%arg0: i32, %arg1: i32) -> (i32, i32) {
    %c0_i32 = arith.constant 0 : i32
    %c0_i32_0 = arith.constant 0 : i32
    return %arg1, %c0_i32 : i32, i32
  }
  func.func @transform_4(%arg0: i32, %arg1: i32) -> (i32, i32, i32) {
    %c0_i32 = arith.constant 0 : i32
    %c0_i32_0 = arith.constant 0 : i32
    %c0_i32_1 = arith.constant 0 : i32
    return %arg0, %c0_i32, %c0_i32_0 : i32, i32, i32
  }
}

</mosaic_0001>

<llo_original>
// kernel: tpu_custom_call.1
$region0: #{tpu_custom_call.1}
  #allocation0 [shape = 'u32[]', space=smem, size = 0x4, offset = 0x4, fixed_abs, tag = 'smem constant byte address 0x4 - core index']
  #allocation1 [shape = 'u32[144,128]{1,0:T(1,128)}', space=vmem, size = 0x12000, scoped, tag = 'internal scratch']
  #allocation2 [shape = 'f32[1,8]{1,0:T(1,128)}', space=vmem, size = 0x200, scoped, tag = 'scratch operand']
  #allocation3 [shape = 'f32[1,8]{1,0:T(1,128)}', space=vmem, size = 0x200, scoped, tag = 'scratch operand']
  #allocation4 [shape = 'f32[1,8]{1,0:T(1,128)}', space=vmem, size = 0x200, scoped, tag = 'scratch operand']
  #allocation5 [shape = 'f32[1,8]{1,0:T(1,128)}', space=vmem, size = 0x200, scoped, tag = 'scratch operand']
  %s0 = inlined_call_operand.hbm [shape: f32[8,32], index: 0, kind: input, shape index: {}]
  %s1 = inlined_call_operand.hbm [shape: f32[8,32], index: 1, kind: input, shape index: {}]
  %s2 = inlined_call_operand.hbm [shape: f32[8,32], index: 2, kind: input, shape index: {}]
  %s3 = inlined_call_operand.vmem [shape: f32[8,32], index: 3, kind: input, shape index: {}]
  %s4 = inlined_call_operand.hbm [shape: f32[1,8,8], index: 4, kind: output, shape index: {}]
  %s5 = sld [smem:[#allocation0]]
  $region46: #{tpu_custom_call.1} parent=0
    _
  %s7 = ssub.s32 1, %s5
  %s8 = scalar_select 0, %s7, %s5
  $region1: #{tpu_custom_call.1} parent=0
    #allocation6 [shape = 'u8[4096]{0}', space=vmem, size = 0x1000, scoped, tag = 'input window, operand 0, single buffered']
    #allocation7 [shape = 's32[1]{0}', space=sflag, size = 0x4, scoped, tag = 'scoped memory for tpu_custom_call.1']
    #allocation8 [shape = 's32[1]{0}', space=sflag, size = 0x4, scoped, tag = 'scoped memory for tpu_custom_call.1']
    #allocation9 [shape = 'u8[4096]{0}', space=vmem, size = 0x1000, scoped, tag = 'input window, operand 1, single buffered']
    #allocation10 [shape = 's32[1]{0}', space=sflag, size = 0x4, scoped, tag = 'scoped memory for tpu_custom_call.1']
    #allocation11 [shape = 'u8[4096]{0}', space=vmem, size = 0x1000, scoped, tag = 'input window, operand 2, single buffered']
    #allocation12 [shape = 'u8[4096]{0}', space=vmem, size = 0x1000, scoped, tag = 'output window, operand 0, single buffered']
    %9 = vsyncpa [#allocation7], 0
    %10 = vsyncpa [#allocation10], 0
    %11 = vsyncpa [#allocation8], 0
    // Predicated region
    $region2: #{tpu_custom_call.1} parent=1 // pred_check
      _
    $region3: #{tpu_custom_call.1} parent=1 // pred_check_branch
      %13 = sbr.rel (0) target = $region5
    $region4: #{tpu_custom_call.1} parent=1 // pred_region
      %s15 = ssub.s32 128, 128
      %16 = vsyncadd [#allocation7], %s15
      %s18 = sshll.u32 [#allocation6], 4
      %s19 = int_to_ptr.vmem [resolvable:$true] %s18
      %21 = dma.hbm_to_vmem [thread:$0]  %s0, 128, %s19, [#allocation7]
    $region5: #{tpu_custom_call.1} parent=1 // pred_fallthru
      _
    // Predicated region
    $region6: #{tpu_custom_call.1} parent=1 // pred_check
      _
    $region7: #{tpu_custom_call.1} parent=1 // pred_check_branch
      %23 = sbr.rel (0) target = $region9
    $region8: #{tpu_custom_call.1} parent=1 // pred_region
      %s25 = ssub.s32 128, 128
      %26 = vsyncadd [#allocation10], %s25
      %s28 = sshll.u32 [#allocation9], 4
      %s29 = int_to_ptr.vmem [resolvable:$true] %s28
      %31 = dma.hbm_to_vmem [thread:$0]  %s1, 128, %s29, [#allocation10]
    $region9: #{tpu_custom_call.1} parent=1 // pred_fallthru
      _
    // Predicated region
    $region10: #{tpu_custom_call.1} parent=1 // pred_check
      _
    $region11: #{tpu_custom_call.1} parent=1 // pred_check_branch
      %33 = sbr.rel (0) target = $region13
    $region12: #{tpu_custom_call.1} parent=1 // pred_region
      %s35 = ssub.s32 128, 128
      %36 = vsyncadd [#allocation10], %s35
      %s38 = sshll.u32 [#allocation11], 4
      %s39 = int_to_ptr.vmem [resolvable:$true] %s38
      %41 = dma.hbm_to_vmem [thread:$0]  %s2, 128, %s39, [#allocation10]
    $region13: #{tpu_custom_call.1} parent=1 // pred_fallthru
      _
    // Predicated region
    $region14: #{tpu_custom_call.1} parent=1 // pred_check
      _
    $region15: #{tpu_custom_call.1} parent=1 // pred_check_branch
      %43 = sbr.rel (0) target = $region17
    $region16: #{tpu_custom_call.1} parent=1 // pred_region
      _
    $region17: #{tpu_custom_call.1} parent=1 // pred_fallthru
      _
    // Predicated region
    $region18: #{tpu_custom_call.1} parent=1 // pred_check
      _
    $region19: #{tpu_custom_call.1} parent=1 // pred_check_branch
      %45 = sbr.rel (0) target = $region21
    $region20: #{tpu_custom_call.1} parent=1 // pred_region
      %46 = dma.done [#allocation7], 128
    $region21: #{tpu_custom_call.1} parent=1 // pred_fallthru
      _
    // Predicated region
    $region22: #{tpu_custom_call.1} parent=1 // pred_check
      _
    $region23: #{tpu_custom_call.1} parent=1 // pred_check_branch
      %48 = sbr.rel (0) target = $region25
    $region24: #{tpu_custom_call.1} parent=1 // pred_region
      %49 = dma.done [#allocation10], 128
    $region25: #{tpu_custom_call.1} parent=1 // pred_fallthru
      _
    // Predicated region
    $region26: #{tpu_custom_call.1} parent=1 // pred_check
      _
    $region27: #{tpu_custom_call.1} parent=1 // pred_check_branch
      %51 = sbr.rel (0) target = $region29
    $region28: #{tpu_custom_call.1} parent=1 // pred_region
      %52 = dma.done [#allocation10], 128
    $region29: #{tpu_custom_call.1} parent=1 // pred_fallthru
      _
    %p53 = scmp.eq.s32.totalorder 0, 0
    // Predicated region
    $region30: #{tpu_custom_call.1} parent=1 // pred_check
      %p54 = pneg %p53
    $region31: #{tpu_custom_call.1} parent=1 // pred_check_branch
      %56 = sbr.rel (%p54) target = $region33
    $region32: #{tpu_custom_call.1} parent=1 // pred_region
      %vm57 = vcmask 57344
      %58 = vst.msk [vmem:[#allocation2] sm:$0x1] %vm57, -1e+30
      %59 = vst.msk [vmem:[#allocation3] sm:$0x1] %vm57, 0.0
      %60 = vst.msk [vmem:[#allocation4] sm:$0x1] %vm57, -1e+30
      %61 = vst.msk [vmem:[#allocation5] sm:$0x1] %vm57, 0.0
    $region33: #{tpu_custom_call.1} parent=1 // pred_fallthru
      _
    %v62 = vld [vmem:[%s3] sm:$0xff]
    %v63 = vld [vmem:[#allocation6] sm:$0xff]
    %vm64 = vcmask 261120
    %v66 = vsel %vm64, %v62, 0
    %v69 = vsel %vm64, %v63, 0
    %71 = vmatprep.subr.mxu0 0.0
    %v72 = vand.u32 %v69, 4294901760
    %73 = vmatpush1.xpose.msra.mxu0 %v72
    %74 = vmatprep.subr.mxu0 0.0
    %75 = vmatpush1.xpose.msra.mxu0 0.0
    %76 = vmatprep.subr.mxu0 0.0
    %77 = vmatpush1.xpose.msra.mxu0 0.0
    %78 = vmatprep.subr.mxu0 0.0
    %79 = vmatpush1.xpose.msra.mxu0 0.0
    %80 = vmatprep.subr.mxu0 0.0
    %81 = vmatpush1.xpose.msra.mxu0 0.0
    %82 = vmatprep.subr.mxu0 0.0
    %83 = vmatpush1.xpose.msra.mxu0 0.0
    %84 = vmatprep.subr.mxu0 0.0
    %85 = vmatpush1.xpose.msra.mxu0 0.0
    %86 = vmatprep.subr.mxu0 0.0
    %87 = vmatpush1.xpose.msra.mxu0 0.0
    %88 = vmatprep.subr.mxu0 0.0
    %89 = vmatpush1.xpose.msra.mxu0 0.0
    %90 = vmatprep.subr.mxu0 0.0
    %91 = vmatpush1.xpose.msra.mxu0 0.0
    %92 = vmatprep.subr.mxu0 0.0
    %93 = vmatpush1.xpose.msra.mxu0 0.0
    %94 = vmatprep.subr.mxu0 0.0
    %95 = vmatpush1.xpose.msra.mxu0 0.0
    %96 = vmatprep.subr.mxu0 0.0
    %97 = vmatpush1.xpose.msra.mxu0 0.0
    %98 = vmatprep.subr.mxu0 0.0
    %99 = vmatpush1.xpose.msra.mxu0 0.0
    %100 = vmatprep.subr.mxu0 0.0
    %101 = vmatpush1.xpose.msra.mxu0 0.0
    %102 = vmatprep.subr.mxu0 0.0
    %103 = vmatpush1.xpose.msra.mxu0 0.0
    %104 = vmatprep.subr.mxu0 0.0
    %105 = vmatpush1.xpose.msra.mxu0 0.0
    %106 = vmatprep.subr.mxu0 0.0
    %107 = vmatpush1.xpose.msra.mxu0 0.0
    %108 = vmatprep.subr.mxu0 0.0
    %109 = vmatpush1.xpose.msra.mxu0 0.0
    %110 = vmatprep.subr.mxu0 0.0
    %111 = vmatpush1.xpose.msra.mxu0 0.0
    %112 = vmatprep.subr.mxu0 0.0
    %113 = vmatpush1.xpose.msra.mxu0 0.0
    %114 = vmatprep.subr.mxu0 0.0
    %115 = vmatpush1.xpose.msra.mxu0 0.0
    %116 = vmatprep.subr.mxu0 0.0
    %117 = vmatpush1.xpose.msra.mxu0 0.0
    %118 = vmatprep.subr.mxu0 0.0
    %119 = vmatpush1.xpose.msra.mxu0 0.0
    %120 = vmatprep.subr.mxu0 0.0
    %121 = vmatpush1.xpose.msra.mxu0 0.0
    %122 = vmatprep.subr.mxu0 0.0
    %123 = vmatpush1.xpose.msra.mxu0 0.0
    %124 = vmatprep.subr.mxu0 0.0
    %125 = vmatpush1.xpose.msra.mxu0 0.0
    %126 = vmatprep.subr.mxu0 0.0
    %127 = vmatpush1.xpose.msra.mxu0 0.0
    %128 = vmatprep.subr.mxu0 0.0
    %129 = vmatpush1.xpose.msra.mxu0 0.0
    %130 = vmatprep.subr.mxu0 0.0
    %131 = vmatpush1.xpose.msra.mxu0 0.0
    %132 = vmatprep.subr.mxu0 0.0
    %133 = vmatpush1.xpose.msra.mxu0 0.0
    %134 = vmatprep.subr.mxu0 0.0
    %135 = vmatpush1.xpose.msra.mxu0 0.0
    %136 = vmatprep.mubr.f32.mxu0 0.0
    %v137 = vand.u32 %v66, 4294901760
    %v138 = vsub.f32 %v66, %v137
    %v139 = vand.u32 %v138, 4294901760
    %v140 = vsub.f32 %v138, %v139
    %v141 = vand.u32 %v140, 4294901760
    %142 = vmatmul.mubr.f32.gmra.mrb[0].mxu0 %v141
    %v143 = vpop.f32.mrb[0].mxu0
    %v144 = vadd.f32 0.0, %v143
    %v145 = vpop.f32.mrb[0].mxu0
    %146 = vdwg.mxu0
    %147 = vmatprep.subr.mxu0 0.0
    %v148 = vand.u32 %v69, 4294901760
    %v149 = vsub.f32 %v69, %v148
    %v150 = vand.u32 %v149, 4294901760
    %v151 = vsub.f32 %v149, %v150
    %v152 = vand.u32 %v151, 4294901760
    %153 = vmatpush1.xpose.msra.mxu0 %v152
    %154 = vmatprep.subr.mxu0 0.0
    %155 = vmatpush1.xpose.msra.mxu0 0.0
    %156 = vmatprep.subr.mxu0 0.0
    %157 = vmatpush1.xpose.msra.mxu0 0.0
    %158 = vmatprep.subr.mxu0 0.0
    %159 = vmatpush1.xpose.msra.mxu0 0.0
    %160 = vmatprep.subr.mxu0 0.0
    %161 = vmatpush1.xpose.msra.mxu0 0.0
    %162 = vmatprep.subr.mxu0 0.0
    %163 = vmatpush1.xpose.msra.mxu0 0.0
    %164 = vmatprep.subr.mxu0 0.0
    %165 = vmatpush1.xpose.msra.mxu0 0.0
    %166 = vmatprep.subr.mxu0 0.0
    %167 = vmatpush1.xpose.msra.mxu0 0.0
    %168 = vmatprep.subr.mxu0 0.0
    %169 = vmatpush1.xpose.msra.mxu0 0.0
    %170 = vmatprep.subr.mxu0 0.0
    %171 = vmatpush1.xpose.msra.mxu0 0.0
    %172 = vmatprep.subr.mxu0 0.0
    %173 = vmatpush1.xpose.msra.mxu0 0.0
    %174 = vmatprep.subr.mxu0 0.0
    %175 = vmatpush1.xpose.msra.mxu0 0.0
    %176 = vmatprep.subr.mxu0 0.0
    %177 = vmatpush1.xpose.msra.mxu0 0.0
    %178 = vmatprep.subr.mxu0 0.0
    %179 = vmatpush1.xpose.msra.mxu0 0.0
    %180 = vmatprep.subr.mxu0 0.0
    %181 = vmatpush1.xpose.msra.mxu0 0.0
    %182 = vmatprep.subr.mxu0 0.0
    %183 = vmatpush1.xpose.msra.mxu0 0.0
    %184 = vmatprep.subr.mxu0 0.0
    %185 = vmatpush1.xpose.msra.mxu0 0.0
    %186 = vmatprep.subr.mxu0 0.0
    %187 = vmatpush1.xpose.msra.mxu0 0.0
    %188 = vmatprep.subr.mxu0 0.0
    %189 = vmatpush1.xpose.msra.mxu0 0.0
    %190 = vmatprep.subr.mxu0 0.0
    %191 = vmatpush1.xpose.msra.mxu0 0.0
    %192 = vmatprep.subr.mxu0 0.0
    %193 = vmatpush1.xpose.msra.mxu0 0.0
    %194 = vmatprep.subr.mxu0 0.0
    %195 = vmatpush1.xpose.msra.mxu0 0.0
    %196 = vmatprep.subr.mxu0 0.0
    %197 = vmatpush1.xpose.msra.mxu0 0.0
    %198 = vmatprep.subr.mxu0 0.0
    %199 = vmatpush1.xpose.msra.mxu0 0.0
    %200 = vmatprep.subr.mxu0 0.0
    %201 = vmatpush1.xpose.msra.mxu0 0.0
    %202 = vmatprep.subr.mxu0 0.0
    %203 = vmatpush1.xpose.msra.mxu0 0.0
    %204 = vmatprep.subr.mxu0 0.0
    %205 = vmatpush1.xpose.msra.mxu0 0.0
    %206 = vmatprep.subr.mxu0 0.0
    %207 = vmatpush1.xpose.msra.mxu0 0.0
    %208 = vmatprep.subr.mxu0 0.0
    %209 = vmatpush1.xpose.msra.mxu0 0.0
    %210 = vmatprep.subr.mxu0 0.0
    %211 = vmatpush1.xpose.msra.mxu0 0.0
    %212 = vmatprep.subr.mxu0 0.0
    %213 = vmatpush1.xpose.msra.mxu0 0.0
    %214 = vmatprep.subr.mxu0 0.0
    %215 = vmatpush1.xpose.msra.mxu0 0.0
    %216 = vmatprep.mubr.f32.mxu0 0.0
    %v217 = vand.u32 %v66, 4294901760
    %218 = vmatmul.mubr.f32.gmra.mrb[0].mxu0 %v217
    %v219 = vpop.f32.mrb[0].mxu0
    %v220 = vadd.f32 %v144, %v219
    %v221 = vpop.f32.mrb[0].mxu0
    %222 = vdwg.mxu0
    %223 = vmatprep.subr.mxu0 0.0
    %v224 = vand.u32 %v69, 4294901760
    %v225 = vsub.f32 %v69, %v224
    %226 = vmatpush1.xpose.msra.mxu0 %v225
    %227 = vmatprep.subr.mxu0 0.0
    %228 = vmatpush1.xpose.msra.mxu0 0.0
    %229 = vmatprep.subr.mxu0 0.0
    %230 = vmatpush1.xpose.msra.mxu0 0.0
    %231 = vmatprep.subr.mxu0 0.0
    %232 = vmatpush1.xpose.msra.mxu0 0.0
    %233 = vmatprep.subr.mxu0 0.0
    %234 = vmatpush1.xpose.msra.mxu0 0.0
    %235 = vmatprep.subr.mxu0 0.0
    %236 = vmatpush1.xpose.msra.mxu0 0.0
    %237 = vmatprep.subr.mxu0 0.0
    %238 = vmatpush1.xpose.msra.mxu0 0.0
    %239 = vmatprep.subr.mxu0 0.0
    %240 = vmatpush1.xpose.msra.mxu0 0.0
    %241 = vmatprep.subr.mxu0 0.0
    %242 = vmatpush1.xpose.msra.mxu0 0.0
    %243 = vmatprep.subr.mxu0 0.0
    %244 = vmatpush1.xpose.msra.mxu0 0.0
    %245 = vmatprep.subr.mxu0 0.0
    %246 = vmatpush1.xpose.msra.mxu0 0.0
    %247 = vmatprep.subr.mxu0 0.0
    %248 = vmatpush1.xpose.msra.mxu0 0.0
    %249 = vmatprep.subr.mxu0 0.0
    %250 = vmatpush1.xpose.msra.mxu0 0.0
    %251 = vmatprep.subr.mxu0 0.0
    %252 = vmatpush1.xpose.msra.mxu0 0.0
    %253 = vmatprep.subr.mxu0 0.0
    %254 = vmatpush1.xpose.msra.mxu0 0.0
    %255 = vmatprep.subr.mxu0 0.0
    %256 = vmatpush1.xpose.msra.mxu0 0.0
    %257 = vmatprep.subr.mxu0 0.0
    %258 = vmatpush1.xpose.msra.mxu0 0.0
    %259 = vmatprep.subr.mxu0 0.0
    %260 = vmatpush1.xpose.msra.mxu0 0.0
    %261 = vmatprep.subr.mxu0 0.0
    %262 = vmatpush1.xpose.msra.mxu0 0.0
    %263 = vmatprep.subr.mxu0 0.0
    %264 = vmatpush1.xpose.msra.mxu0 0.0
    %265 = vmatprep.subr.mxu0 0.0
    %266 = vmatpush1.xpose.msra.mxu0 0.0
    %267 = vmatprep.subr.mxu0 0.0
    %268 = vmatpush1.xpose.msra.mxu0 0.0
    %269 = vmatprep.subr.mxu0 0.0
    %270 = vmatpush1.xpose.msra.mxu0 0.0
    %271 = vmatprep.subr.mxu0 0.0
    %272 = vmatpush1.xpose.msra.mxu0 0.0
    %273 = vmatprep.subr.mxu0 0.0
    %274 = vmatpush1.xpose.msra.mxu0 0.0
    %275 = vmatprep.subr.mxu0 0.0
    %276 = vmatpush1.xpose.msra.mxu0 0.0
    %277 = vmatprep.subr.mxu0 0.0
    %278 = vmatpush1.xpose.msra.mxu0 0.0
    %279 = vmatprep.subr.mxu0 0.0
    %280 = vmatpush1.xpose.msra.mxu0 0.0
    %281 = vmatprep.subr.mxu0 0.0
    %282 = vmatpush1.xpose.msra.mxu0 0.0
    %283 = vmatprep.subr.mxu0 0.0
    %284 = vmatpush1.xpose.msra.mxu0 0.0
    %285 = vmatprep.subr.mxu0 0.0
    %286 = vmatpush1.xpose.msra.mxu0 0.0
    %287 = vmatprep.subr.mxu0 0.0
    %288 = vmatpush1.xpose.msra.mxu0 0.0
    %289 = vmatprep.mubr.f32.mxu0 0.0
    %v290 = vand.u32 %v66, 4294901760
    %v291 = vsub.f32 %v66, %v290
    %292 = vmatmul.mubr.f32.gmra.mrb[0].mxu0 %v291
    %v293 = vpop.f32.mrb[0].mxu0
    %v294 = vadd.f32 %v220, %v293
    %v295 = vpop.f32.mrb[0].mxu0
    %296 = vdwg.mxu0
    %297 = vmatprep.subr.mxu0 0.0
    %v298 = vand.u32 %v69, 4294901760
    %299 = vmatpush1.xpose.msra.mxu0 %v298
    %300 = vmatprep.subr.mxu0 0.0
    %301 = vmatpush1.xpose.msra.mxu0 0.0
    %302 = vmatprep.subr.mxu0 0.0
    %303 = vmatpush1.xpose.msra.mxu0 0.0
    %304 = vmatprep.subr.mxu0 0.0
    %305 = vmatpush1.xpose.msra.mxu0 0.0
    %306 = vmatprep.subr.mxu0 0.0
    %307 = vmatpush1.xpose.msra.mxu0 0.0
    %308 = vmatprep.subr.mxu0 0.0
    %309 = vmatpush1.xpose.msra.mxu0 0.0
    %310 = vmatprep.subr.mxu0 0.0
    %311 = vmatpush1.xpose.msra.mxu0 0.0
    %312 = vmatprep.subr.mxu0 0.0
    %313 = vmatpush1.xpose.msra.mxu0 0.0
    %314 = vmatprep.subr.mxu0 0.0
    %315 = vmatpush1.xpose.msra.mxu0 0.0
    %316 = vmatprep.subr.mxu0 0.0
    %317 = vmatpush1.xpose.msra.mxu0 0.0
    %318 = vmatprep.subr.mxu0 0.0
    %319 = vmatpush1.xpose.msra.mxu0 0.0
    %320 = vmatprep.subr.mxu0 0.0
    %321 = vmatpush1.xpose.msra.mxu0 0.0
    %322 = vmatprep.subr.mxu0 0.0
    %323 = vmatpush1.xpose.msra.mxu0 0.0
    %324 = vmatprep.subr.mxu0 0.0
    %325 = vmatpush1.xpose.msra.mxu0 0.0
    %326 = vmatprep.subr.mxu0 0.0
    %327 = vmatpush1.xpose.msra.mxu0 0.0
    %328 = vmatprep.subr.mxu0 0.0
    %329 = vmatpush1.xpose.msra.mxu0 0.0
    %330 = vmatprep.subr.mxu0 0.0
    %331 = vmatpush1.xpose.msra.mxu0 0.0
    %332 = vmatprep.subr.mxu0 0.0
    %333 = vmatpush1.xpose.msra.mxu0 0.0
    %334 = vmatprep.subr.mxu0 0.0
    %335 = vmatpush1.xpose.msra.mxu0 0.0
    %336 = vmatprep.subr.mxu0 0.0
    %337 = vmatpush1.xpose.msra.mxu0 0.0
    %338 = vmatprep.subr.mxu0 0.0
    %339 = vmatpush1.xpose.msra.mxu0 0.0
    %340 = vmatprep.subr.mxu0 0.0
    %341 = vmatpush1.xpose.msra.mxu0 0.0
    %342 = vmatprep.subr.mxu0 0.0
    %343 = vmatpush1.xpose.msra.mxu0 0.0
    %344 = vmatprep.subr.mxu0 0.0
    %345 = vmatpush1.xpose.msra.mxu0 0.0
    %346 = vmatprep.subr.mxu0 0.0
    %347 = vmatpush1.xpose.msra.mxu0 0.0
    %348 = vmatprep.subr.mxu0 0.0
    %349 = vmatpush1.xpose.msra.mxu0 0.0
    %350 = vmatprep.subr.mxu0 0.0
    %351 = vmatpush1.xpose.msra.mxu0 0.0
    %352 = vmatprep.subr.mxu0 0.0
    %353 = vmatpush1.xpose.msra.mxu0 0.0
    %354 = vmatprep.subr.mxu0 0.0
    %355 = vmatpush1.xpose.msra.mxu0 0.0
    %356 = vmatprep.subr.mxu0 0.0
    %357 = vmatpush1.xpose.msra.mxu0 0.0
    %358 = vmatprep.subr.mxu0 0.0
    %359 = vmatpush1.xpose.msra.mxu0 0.0
    %360 = vmatprep.subr.mxu0 0.0
    %361 = vmatpush1.xpose.msra.mxu0 0.0
    %362 = vmatprep.mubr.f32.mxu0 0.0
    %v363 = vand.u32 %v66, 4294901760
    %v364 = vsub.f32 %v66, %v363
    %v365 = vand.u32 %v364, 4294901760
    %366 = vmatmul.mubr.f32.gmra.mrb[0].mxu0 %v365
    %v367 = vpop.f32.mrb[0].mxu0
    %v368 = vadd.f32 %v294, %v367
    %v369 = vpop.f32.mrb[0].mxu0
    %370 = vdwg.mxu0
    %371 = vmatprep.subr.mxu0 0.0
    %v372 = vand.u32 %v69, 4294901760
    %v373 = vsub.f32 %v69, %v372
    %v374 = vand.u32 %v373, 4294901760
    %375 = vmatpush1.xpose.msra.mxu0 %v374
    %376 = vmatprep.subr.mxu0 0.0
    %377 = vmatpush1.xpose.msra.mxu0 0.0
    %378 = vmatprep.subr.mxu0 0.0
    %379 = vmatpush1.xpose.msra.mxu0 0.0
    %380 = vmatprep.subr.mxu0 0.0
    %381 = vmatpush1.xpose.msra.mxu0 0.0
    %382 = vmatprep.subr.mxu0 0.0
    %383 = vmatpush1.xpose.msra.mxu0 0.0
    %384 = vmatprep.subr.mxu0 0.0
    %385 = vmatpush1.xpose.msra.mxu0 0.0
    %386 = vmatprep.subr.mxu0 0.0
    %387 = vmatpush1.xpose.msra.mxu0 0.0
    %388 = vmatprep.subr.mxu0 0.0
    %389 = vmatpush1.xpose.msra.mxu0 0.0
    %390 = vmatprep.subr.mxu0 0.0
    %391 = vmatpush1.xpose.msra.mxu0 0.0
    %392 = vmatprep.subr.mxu0 0.0
    %393 = vmatpush1.xpose.msra.mxu0 0.0
    %394 = vmatprep.subr.mxu0 0.0
    %395 = vmatpush1.xpose.msra.mxu0 0.0
    %396 = vmatprep.subr.mxu0 0.0
    %397 = vmatpush1.xpose.msra.mxu0 0.0
    %398 = vmatprep.subr.mxu0 0.0
    %399 = vmatpush1.xpose.msra.mxu0 0.0
    %400 = vmatprep.subr.mxu0 0.0
    %401 = vmatpush1.xpose.msra.mxu0 0.0
    %402 = vmatprep.subr.mxu0 0.0
    %403 = vmatpush1.xpose.msra.mxu0 0.0
    %404 = vmatprep.subr.mxu0 0.0
    %405 = vmatpush1.xpose.msra.mxu0 0.0
    %406 = vmatprep.subr.mxu0 0.0
    %407 = vmatpush1.xpose.msra.mxu0 0.0
    %408 = vmatprep.subr.mxu0 0.0
    %409 = vmatpush1.xpose.msra.mxu0 0.0
    %410 = vmatprep.subr.mxu0 0.0
    %411 = vmatpush1.xpose.msra.mxu0 0.0
    %412 = vmatprep.subr.mxu0 0.0
    %413 = vmatpush1.xpose.msra.mxu0 0.0
    %414 = vmatprep.subr.mxu0 0.0
    %415 = vmatpush1.xpose.msra.mxu0 0.0
    %416 = vmatprep.subr.mxu0 0.0
    %417 = vmatpush1.xpose.msra.mxu0 0.0
    %418 = vmatprep.subr.mxu0 0.0
    %419 = vmatpush1.xpose.msra.mxu0 0.0
    %420 = vmatprep.subr.mxu0 0.0
    %421 = vmatpush1.xpose.msra.mxu0 0.0
    %422 = vmatprep.subr.mxu0 0.0
    %423 = vmatpush1.xpose.msra.mxu0 0.0
    %424 = vmatprep.subr.mxu0 0.0
    %425 = vmatpush1.xpose.msra.mxu0 0.0
    %426 = vmatprep.subr.mxu0 0.0
    %427 = vmatpush1.xpose.msra.mxu0 0.0
    %428 = vmatprep.subr.mxu0 0.0
    %429 = vmatpush1.xpose.msra.mxu0 0.0
    %430 = vmatprep.subr.mxu0 0.0
    %431 = vmatpush1.xpose.msra.mxu0 0.0
    %432 = vmatprep.subr.mxu0 0.0
    %433 = vmatpush1.xpose.msra.mxu0 0.0
    %434 = vmatprep.subr.mxu0 0.0
    %435 = vmatpush1.xpose.msra.mxu0 0.0
    %436 = vmatprep.subr.mxu0 0.0
    %437 = vmatpush1.xpose.msra.mxu0 0.0
    %438 = vmatprep.mubr.f32.mxu0 0.0
    %v439 = vand.u32 %v66, 4294901760
    %440 = vmatmul.mubr.f32.gmra.mrb[0].mxu0 %v439
    %v441 = vpop.f32.mrb[0].mxu0
    %v442 = vadd.f32 %v368, %v441
    %v443 = vpop.f32.mrb[0].mxu0
    %444 = vdwg.mxu0
    %445 = vmatprep.subr.mxu0 0.0
    %v446 = vand.u32 %v69, 4294901760
    %447 = vmatpush1.xpose.msra.mxu0 %v446
    %448 = vmatprep.subr.mxu0 0.0
    %449 = vmatpush1.xpose.msra.mxu0 0.0
    %450 = vmatprep.subr.mxu0 0.0
    %451 = vmatpush1.xpose.msra.mxu0 0.0
    %452 = vmatprep.subr.mxu0 0.0
    %453 = vmatpush1.xpose.msra.mxu0 0.0
    %454 = vmatprep.subr.mxu0 0.0
    %455 = vmatpush1.xpose.msra.mxu0 0.0
    %456 = vmatprep.subr.mxu0 0.0
    %457 = vmatpush1.xpose.msra.mxu0 0.0
    %458 = vmatprep.subr.mxu0 0.0
    %459 = vmatpush1.xpose.msra.mxu0 0.0
    %460 = vmatprep.subr.mxu0 0.0
    %461 = vmatpush1.xpose.msra.mxu0 0.0
    %462 = vmatprep.subr.mxu0 0.0
    %463 = vmatpush1.xpose.msra.mxu0 0.0
    %464 = vmatprep.subr.mxu0 0.0
    %465 = vmatpush1.xpose.msra.mxu0 0.0
    %466 = vmatprep.subr.mxu0 0.0
    %467 = vmatpush1.xpose.msra.mxu0 0.0
    %468 = vmatprep.subr.mxu0 0.0
    %469 = vmatpush1.xpose.msra.mxu0 0.0
    %470 = vmatprep.subr.mxu0 0.0
    %471 = vmatpush1.xpose.msra.mxu0 0.0
    %472 = vmatprep.subr.mxu0 0.0
    %473 = vmatpush1.xpose.msra.mxu0 0.0
    %474 = vmatprep.subr.mxu0 0.0
    %475 = vmatpush1.xpose.msra.mxu0 0.0
    %476 = vmatprep.subr.mxu0 0.0
    %477 = vmatpush1.xpose.msra.mxu0 0.0
    %478 = vmatprep.subr.mxu0 0.0
    %479 = vmatpush1.xpose.msra.mxu0 0.0
    %480 = vmatprep.subr.mxu0 0.0
    %481 = vmatpush1.xpose.msra.mxu0 0.0
    %482 = vmatprep.subr.mxu0 0.0
    %483 = vmatpush1.xpose.msra.mxu0 0.0
    %484 = vmatprep.subr.mxu0 0.0
    %485 = vmatpush1.xpose.msra.mxu0 0.0
    %486 = vmatprep.subr.mxu0 0.0
    %487 = vmatpush1.xpose.msra.mxu0 0.0
    %488 = vmatprep.subr.mxu0 0.0
    %489 = vmatpush1.xpose.msra.mxu0 0.0
    %490 = vmatprep.subr.mxu0 0.0
    %491 = vmatpush1.xpose.msra.mxu0 0.0
    %492 = vmatprep.subr.mxu0 0.0
    %493 = vmatpush1.xpose.msra.mxu0 0.0
    %494 = vmatprep.subr.mxu0 0.0
    %495 = vmatpush1.xpose.msra.mxu0 0.0
    %496 = vmatprep.subr.mxu0 0.0
    %497 = vmatpush1.xpose.msra.mxu0 0.0
    %498 = vmatprep.subr.mxu0 0.0
    %499 = vmatpush1.xpose.msra.mxu0 0.0
    %500 = vmatprep.subr.mxu0 0.0
    %501 = vmatpush1.xpose.msra.mxu0 0.0
    %502 = vmatprep.subr.mxu0 0.0
    %503 = vmatpush1.xpose.msra.mxu0 0.0
    %504 = vmatprep.subr.mxu0 0.0
    %505 = vmatpush1.xpose.msra.mxu0 0.0
    %506 = vmatprep.subr.mxu0 0.0
    %507 = vmatpush1.xpose.msra.mxu0 0.0
    %508 = vmatprep.subr.mxu0 0.0
    %509 = vmatpush1.xpose.msra.mxu0 0.0
    %510 = vmatprep.mubr.f32.mxu0 0.0
    %v511 = vand.u32 %v66, 4294901760
    %512 = vmatmul.mubr.f32.gmra.mrb[0].mxu0 %v511
    %v513 = vpop.f32.mrb[0].mxu0
    %v514 = vadd.f32 %v442, %v513
    %v515 = vpop.f32.mrb[0].mxu0
    %516 = vdwg.mxu0
    %v517 = vld [vmem:[#allocation2] sm:$0x1]
    %vm518 = vcmask 64512
    %v519 = vsel %vm518, %v514, -inf
    %v520 = vrot.slane %v519, 4
    %v521 = vmax.f32 %v519, %v520
    %v522 = vrot.slane %v521, 2
    %v523 = vmax.f32 %v521, %v522
    %v524 = vrot.slane %v523, 1
    %v525 = vmax.f32 %v523, %v524
    %v526 = vmax.f32 %v517, %v525
    %v528 = vlaneseq
    %v529 = vshrl.u32 %v528, 7
    %v530 = vsub.s32 0, %v529
    %v531 = vrot.slane %v526, %v530
    %v533 = vsub.f32 %v514, %v531
    %v534 = vmul.f32 %v533, 1.442695
    %v535 = vpow.pop %v534
    %v536 = vsub.f32 %v517, %v526
    %v537 = vmul.f32 %v536, 1.442695
    %v538 = vpow.pop %v537
    %v539 = vld [vmem:[#allocation3] sm:$0x1]
    %v540 = vmul.f32 %v538, %v539
    %v541 = vsel %vm518, %v535, 0.0
    %v542 = vrot.slane %v541, 4
    %v543 = vadd.f32 %v541, %v542
    %v544 = vrot.slane %v543, 2
    %v545 = vadd.f32 %v543, %v544
    %v546 = vrot.slane %v545, 1
    %v547 = vadd.f32 %v545, %v546
    %v548 = vadd.f32 %v540, %v547
    %vm549 = vcmask 57344
    %550 = vst.msk [vmem:[#allocation3] sm:$0x1] %vm549, %v548
    %551 = vst.msk [vmem:[#allocation2] sm:$0x1] %vm549, %v526
    %v552 = vld [vmem:[#allocation11] sm:$0xff]
    %v553 = vld [vmem:[#allocation9] sm:$0xff]
    %v555 = vsel %vm64, %v552, 0
    %v558 = vsel %vm64, %v553, 0
    %560 = vmatprep.subr.mxu0 0.0
    %v561 = vand.u32 %v558, 4294901760
    %562 = vmatpush1.xpose.msra.mxu0 %v561
    %563 = vmatprep.subr.mxu0 0.0
    %564 = vmatpush1.xpose.msra.mxu0 0.0
    %565 = vmatprep.subr.mxu0 0.0
    %566 = vmatpush1.xpose.msra.mxu0 0.0
    %567 = vmatprep.subr.mxu0 0.0
    %568 = vmatpush1.xpose.msra.mxu0 0.0
    %569 = vmatprep.subr.mxu0 0.0
    %570 = vmatpush1.xpose.msra.mxu0 0.0
    %571 = vmatprep.subr.mxu0 0.0
    %572 = vmatpush1.xpose.msra.mxu0 0.0
    %573 = vmatprep.subr.mxu0 0.0
    %574 = vmatpush1.xpose.msra.mxu0 0.0
    %575 = vmatprep.subr.mxu0 0.0
    %576 = vmatpush1.xpose.msra.mxu0 0.0
    %577 = vmatprep.subr.mxu0 0.0
    %578 = vmatpush1.xpose.msra.mxu0 0.0
    %579 = vmatprep.subr.mxu0 0.0
    %580 = vmatpush1.xpose.msra.mxu0 0.0
    %581 = vmatprep.subr.mxu0 0.0
    %582 = vmatpush1.xpose.msra.mxu0 0.0
    %583 = vmatprep.subr.mxu0 0.0
    %584 = vmatpush1.xpose.msra.mxu0 0.0
    %585 = vmatprep.subr.mxu0 0.0
    %586 = vmatpush1.xpose.msra.mxu0 0.0
    %587 = vmatprep.subr.mxu0 0.0
    %588 = vmatpush1.xpose.msra.mxu0 0.0
    %589 = vmatprep.subr.mxu0 0.0
    %590 = vmatpush1.xpose.msra.mxu0 0.0
    %591 = vmatprep.subr.mxu0 0.0
    %592 = vmatpush1.xpose.msra.mxu0 0.0
    %593 = vmatprep.subr.mxu0 0.0
    %594 = vmatpush1.xpose.msra.mxu0 0.0
    %595 = vmatprep.subr.mxu0 0.0
    %596 = vmatpush1.xpose.msra.mxu0 0.0
    %597 = vmatprep.subr.mxu0 0.0
    %598 = vmatpush1.xpose.msra.mxu0 0.0
    %599 = vmatprep.subr.mxu0 0.0
    %600 = vmatpush1.xpose.msra.mxu0 0.0
    %601 = vmatprep.subr.mxu0 0.0
    %602 = vmatpush1.xpose.msra.mxu0 0.0
    %603 = vmatprep.subr.mxu0 0.0
    %604 = vmatpush1.xpose.msra.mxu0 0.0
    %605 = vmatprep.subr.mxu0 0.0
    %606 = vmatpush1.xpose.msra.mxu0 0.0
    %607 = vmatprep.subr.mxu0 0.0
    %608 = vmatpush1.xpose.msra.mxu0 0.0
    %609 = vmatprep.subr.mxu0 0.0
    %610 = vmatpush1.xpose.msra.mxu0 0.0
    %611 = vmatprep.subr.mxu0 0.0
    %612 = vmatpush1.xpose.msra.mxu0 0.0
    %613 = vmatprep.subr.mxu0 0.0
    %614 = vmatpush1.xpose.msra.mxu0 0.0
    %615 = vmatprep.subr.mxu0 0.0
    %616 = vmatpush1.xpose.msra.mxu0 0.0
    %617 = vmatprep.subr.mxu0 0.0
    %618 = vmatpush1.xpose.msra.mxu0 0.0
    %619 = vmatprep.subr.mxu0 0.0
    %620 = vmatpush1.xpose.msra.mxu0 0.0
    %621 = vmatprep.subr.mxu0 0.0
    %622 = vmatpush1.xpose.msra.mxu0 0.0
    %623 = vmatprep.subr.mxu0 0.0
    %624 = vmatpush1.xpose.msra.mxu0 0.0
    %625 = vmatprep.mubr.f32.mxu0 0.0
    %v626 = vand.u32 %v555, 4294901760
    %v627 = vsub.f32 %v555, %v626
    %v628 = vand.u32 %v627, 4294901760
    %v629 = vsub.f32 %v627, %v628
    %v630 = vand.u32 %v629, 4294901760
    %631 = vmatmul.mubr.f32.gmra.mrb[0].mxu0 %v630
    %v632 = vpop.f32.mrb[0].mxu0
    %v633 = vadd.f32 0.0, %v632
    %v634 = vpop.f32.mrb[0].mxu0
    %635 = vdwg.mxu0
    %636 = vmatprep.subr.mxu0 0.0
    %v637 = vand.u32 %v558, 4294901760
    %v638 = vsub.f32 %v558, %v637
    %v639 = vand.u32 %v638, 4294901760
    %v640 = vsub.f32 %v638, %v639
    %v641 = vand.u32 %v640, 4294901760
    %642 = vmatpush1.xpose.msra.mxu0 %v641
    %643 = vmatprep.subr.mxu0 0.0
    %644 = vmatpush1.xpose.msra.mxu0 0.0
    %645 = vmatprep.subr.mxu0 0.0
    %646 = vmatpush1.xpose.msra.mxu0 0.0
    %647 = vmatprep.subr.mxu0 0.0
    %648 = vmatpush1.xpose.msra.mxu0 0.0
    %649 = vmatprep.subr.mxu0 0.0
    %650 = vmatpush1.xpose.msra.mxu0 0.0
    %651 = vmatprep.subr.mxu0 0.0
    %652 = vmatpush1.xpose.msra.mxu0 0.0
    %653 = vmatprep.subr.mxu0 0.0
    %654 = vmatpush1.xpose.msra.mxu0 0.0
    %655 = vmatprep.subr.mxu0 0.0
    %656 = vmatpush1.xpose.msra.mxu0 0.0
    %657 = vmatprep.subr.mxu0 0.0
    %658 = vmatpush1.xpose.msra.mxu0 0.0
    %659 = vmatprep.subr.mxu0 0.0
    %660 = vmatpush1.xpose.msra.mxu0 0.0
    %661 = vmatprep.subr.mxu0 0.0
    %662 = vmatpush1.xpose.msra.mxu0 0.0
    %663 = vmatprep.subr.mxu0 0.0
    %664 = vmatpush1.xpose.msra.mxu0 0.0
    %665 = vmatprep.subr.mxu0 0.0
    %666 = vmatpush1.xpose.msra.mxu0 0.0
    %667 = vmatprep.subr.mxu0 0.0
    %668 = vmatpush1.xpose.msra.mxu0 0.0
    %669 = vmatprep.subr.mxu0 0.0
    %670 = vmatpush1.xpose.msra.mxu0 0.0
    %671 = vmatprep.subr.mxu0 0.0
    %672 = vmatpush1.xpose.msra.mxu0 0.0
    %673 = vmatprep.subr.mxu0 0.0
    %674 = vmatpush1.xpose.msra.mxu0 0.0
    %675 = vmatprep.subr.mxu0 0.0
    %676 = vmatpush1.xpose.msra.mxu0 0.0
    %677 = vmatprep.subr.mxu0 0.0
    %678 = vmatpush1.xpose.msra.mxu0 0.0
    %679 = vmatprep.subr.mxu0 0.0
    %680 = vmatpush1.xpose.msra.mxu0 0.0
    %681 = vmatprep.subr.mxu0 0.0
    %682 = vmatpush1.xpose.msra.mxu0 0.0
    %683 = vmatprep.subr.mxu0 0.0
    %684 = vmatpush1.xpose.msra.mxu0 0.0
    %685 = vmatprep.subr.mxu0 0.0
    %686 = vmatpush1.xpose.msra.mxu0 0.0
    %687 = vmatprep.subr.mxu0 0.0
    %688 = vmatpush1.xpose.msra.mxu0 0.0
    %689 = vmatprep.subr.mxu0 0.0
    %690 = vmatpush1.xpose.msra.mxu0 0.0
    %691 = vmatprep.subr.mxu0 0.0
    %692 = vmatpush1.xpose.msra.mxu0 0.0
    %693 = vmatprep.subr.mxu0 0.0
    %694 = vmatpush1.xpose.msra.mxu0 0.0
    %695 = vmatprep.subr.mxu0 0.0
    %696 = vmatpush1.xpose.msra.mxu0 0.0
    %697 = vmatprep.subr.mxu0 0.0
    %698 = vmatpush1.xpose.msra.mxu0 0.0
    %699 = vmatprep.subr.mxu0 0.0
    %700 = vmatpush1.xpose.msra.mxu0 0.0
    %701 = vmatprep.subr.mxu0 0.0
    %702 = vmatpush1.xpose.msra.mxu0 0.0
    %703 = vmatprep.subr.mxu0 0.0
    %704 = vmatpush1.xpose.msra.mxu0 0.0
    %705 = vmatprep.mubr.f32.mxu0 0.0
    %v706 = vand.u32 %v555, 4294901760
    %707 = vmatmul.mubr.f32.gmra.mrb[0].mxu0 %v706
    %v708 = vpop.f32.mrb[0].mxu0
    %v709 = vadd.f32 %v633, %v708
    %v710 = vpop.f32.mrb[0].mxu0
    %711 = vdwg.mxu0
    %712 = vmatprep.subr.mxu0 0.0
    %v713 = vand.u32 %v558, 4294901760
    %v714 = vsub.f32 %v558, %v713
    %715 = vmatpush1.xpose.msra.mxu0 %v714
    %716 = vmatprep.subr.mxu0 0.0
    %717 = vmatpush1.xpose.msra.mxu0 0.0
    %718 = vmatprep.subr.mxu0 0.0
    %719 = vmatpush1.xpose.msra.mxu0 0.0
    %720 = vmatprep.subr.mxu0 0.0
    %721 = vmatpush1.xpose.msra.mxu0 0.0
    %722 = vmatprep.subr.mxu0 0.0
    %723 = vmatpush1.xpose.msra.mxu0 0.0
    %724 = vmatprep.subr.mxu0 0.0
    %725 = vmatpush1.xpose.msra.mxu0 0.0
    %726 = vmatprep.subr.mxu0 0.0
    %727 = vmatpush1.xpose.msra.mxu0 0.0
    %728 = vmatprep.subr.mxu0 0.0
    %729 = vmatpush1.xpose.msra.mxu0 0.0
    %730 = vmatprep.subr.mxu0 0.0
    %731 = vmatpush1.xpose.msra.mxu0 0.0
    %732 = vmatprep.subr.mxu0 0.0
    %733 = vmatpush1.xpose.msra.mxu0 0.0
    %734 = vmatprep.subr.mxu0 0.0
    %735 = vmatpush1.xpose.msra.mxu0 0.0
    %736 = vmatprep.subr.mxu0 0.0
    %737 = vmatpush1.xpose.msra.mxu0 0.0
    %738 = vmatprep.subr.mxu0 0.0
    %739 = vmatpush1.xpose.msra.mxu0 0.0
    %740 = vmatprep.subr.mxu0 0.0
    %741 = vmatpush1.xpose.msra.mxu0 0.0
    %742 = vmatprep.subr.mxu0 0.0
    %743 = vmatpush1.xpose.msra.mxu0 0.0
    %744 = vmatprep.subr.mxu0 0.0
    %745 = vmatpush1.xpose.msra.mxu0 0.0
    %746 = vmatprep.subr.mxu0 0.0
    %747 = vmatpush1.xpose.msra.mxu0 0.0
    %748 = vmatprep.subr.mxu0 0.0
    %749 = vmatpush1.xpose.msra.mxu0 0.0
    %750 = vmatprep.subr.mxu0 0.0
    %751 = vmatpush1.xpose.msra.mxu0 0.0
    %752 = vmatprep.subr.mxu0 0.0
    %753 = vmatpush1.xpose.msra.mxu0 0.0
    %754 = vmatprep.subr.mxu0 0.0
    %755 = vmatpush1.xpose.msra.mxu0 0.0
    %756 = vmatprep.subr.mxu0 0.0
    %757 = vmatpush1.xpose.msra.mxu0 0.0
    %758 = vmatprep.subr.mxu0 0.0
    %759 = vmatpush1.xpose.msra.mxu0 0.0
    %760 = vmatprep.subr.mxu0 0.0
    %761 = vmatpush1.xpose.msra.mxu0 0.0
    %762 = vmatprep.subr.mxu0 0.0
    %763 = vmatpush1.xpose.msra.mxu0 0.0
    %764 = vmatprep.subr.mxu0 0.0
    %765 = vmatpush1.xpose.msra.mxu0 0.0
    %766 = vmatprep.subr.mxu0 0.0
    %767 = vmatpush1.xpose.msra.mxu0 0.0
    %768 = vmatprep.subr.mxu0 0.0
    %769 = vmatpush1.xpose.msra.mxu0 0.0
    %770 = vmatprep.subr.mxu0 0.0
    %771 = vmatpush1.xpose.msra.mxu0 0.0
    %772 = vmatprep.subr.mxu0 0.0
    %773 = vmatpush1.xpose.msra.mxu0 0.0
    %774 = vmatprep.subr.mxu0 0.0
    %775 = vmatpush1.xpose.msra.mxu0 0.0
    %776 = vmatprep.subr.mxu0 0.0
    %777 = vmatpush1.xpose.msra.mxu0 0.0
    %778 = vmatprep.mubr.f32.mxu0 0.0
    %v779 = vand.u32 %v555, 4294901760
    %v780 = vsub.f32 %v555, %v779
    %781 = vmatmul.mubr.f32.gmra.mrb[0].mxu0 %v780
    %v782 = vpop.f32.mrb[0].mxu0
    %v783 = vadd.f32 %v709, %v782
    %v784 = vpop.f32.mrb[0].mxu0
    %785 = vdwg.mxu0
    %786 = vmatprep.subr.mxu0 0.0
    %v787 = vand.u32 %v558, 4294901760
    %788 = vmatpush1.xpose.msra.mxu0 %v787
    %789 = vmatprep.subr.mxu0 0.0
    %790 = vmatpush1.xpose.msra.mxu0 0.0
    %791 = vmatprep.subr.mxu0 0.0
    %792 = vmatpush1.xpose.msra.mxu0 0.0
    %793 = vmatprep.subr.mxu0 0.0
    %794 = vmatpush1.xpose.msra.mxu0 0.0
    %795 = vmatprep.subr.mxu0 0.0
    %796 = vmatpush1.xpose.msra.mxu0 0.0
    %797 = vmatprep.subr.mxu0 0.0
    %798 = vmatpush1.xpose.msra.mxu0 0.0
    %799 = vmatprep.subr.mxu0 0.0
    %800 = vmatpush1.xpose.msra.mxu0 0.0
    %801 = vmatprep.subr.mxu0 0.0
    %802 = vmatpush1.xpose.msra.mxu0 0.0
    %803 = vmatprep.subr.mxu0 0.0
    %804 = vmatpush1.xpose.msra.mxu0 0.0
    %805 = vmatprep.subr.mxu0 0.0
    %806 = vmatpush1.xpose.msra.mxu0 0.0
    %807 = vmatprep.subr.mxu0 0.0
    %808 = vmatpush1.xpose.msra.mxu0 0.0
    %809 = vmatprep.subr.mxu0 0.0
    %810 = vmatpush1.xpose.msra.mxu0 0.0
    %811 = vmatprep.subr.mxu0 0.0
    %812 = vmatpush1.xpose.msra.mxu0 0.0
    %813 = vmatprep.subr.mxu0 0.0
    %814 = vmatpush1.xpose.msra.mxu0 0.0
    %815 = vmatprep.subr.mxu0 0.0
    %816 = vmatpush1.xpose.msra.mxu0 0.0
    %817 = vmatprep.subr.mxu0 0.0
    %818 = vmatpush1.xpose.msra.mxu0 0.0
    %819 = vmatprep.subr.mxu0 0.0
    %820 = vmatpush1.xpose.msra.mxu0 0.0
    %821 = vmatprep.subr.mxu0 0.0
    %822 = vmatpush1.xpose.msra.mxu0 0.0
    %823 = vmatprep.subr.mxu0 0.0
    %824 = vmatpush1.xpose.msra.mxu0 0.0
    %825 = vmatprep.subr.mxu0 0.0
    %826 = vmatpush1.xpose.msra.mxu0 0.0
    %827 = vmatprep.subr.mxu0 0.0
    %828 = vmatpush1.xpose.msra.mxu0 0.0
    %829 = vmatprep.subr.mxu0 0.0
    %830 = vmatpush1.xpose.msra.mxu0 0.0
    %831 = vmatprep.subr.mxu0 0.0
    %832 = vmatpush1.xpose.msra.mxu0 0.0
    %833 = vmatprep.subr.mxu0 0.0
    %834 = vmatpush1.xpose.msra.mxu0 0.0
    %835 = vmatprep.subr.mxu0 0.0
    %836 = vmatpush1.xpose.msra.mxu0 0.0
    %837 = vmatprep.subr.mxu0 0.0
    %838 = vmatpush1.xpose.msra.mxu0 0.0
    %839 = vmatprep.subr.mxu0 0.0
    %840 = vmatpush1.xpose.msra.mxu0 0.0
    %841 = vmatprep.subr.mxu0 0.0
    %842 = vmatpush1.xpose.msra.mxu0 0.0
    %843 = vmatprep.subr.mxu0 0.0
    %844 = vmatpush1.xpose.msra.mxu0 0.0
    %845 = vmatprep.subr.mxu0 0.0
    %846 = vmatpush1.xpose.msra.mxu0 0.0
    %847 = vmatprep.subr.mxu0 0.0
    %848 = vmatpush1.xpose.msra.mxu0 0.0
    %849 = vmatprep.subr.mxu0 0.0
    %850 = vmatpush1.xpose.msra.mxu0 0.0
    %851 = vmatprep.mubr.f32.mxu0 0.0
    %v852 = vand.u32 %v555, 4294901760
    %v853 = vsub.f32 %v555, %v852
    %v854 = vand.u32 %v853, 4294901760
    %855 = vmatmul.mubr.f32.gmra.mrb[0].mxu0 %v854
    %v856 = vpop.f32.mrb[0].mxu0
    %v857 = vadd.f32 %v783, %v856
    %v858 = vpop.f32.mrb[0].mxu0
    %859 = vdwg.mxu0
    %860 = vmatprep.subr.mxu0 0.0
    %v861 = vand.u32 %v558, 4294901760
    %v862 = vsub.f32 %v558, %v861
    %v863 = vand.u32 %v862, 4294901760
    %864 = vmatpush1.xpose.msra.mxu0 %v863
    %865 = vmatprep.subr.mxu0 0.0
    %866 = vmatpush1.xpose.msra.mxu0 0.0
    %867 = vmatprep.subr.mxu0 0.0
    %868 = vmatpush1.xpose.msra.mxu0 0.0
    %869 = vmatprep.subr.mxu0 0.0
    %870 = vmatpush1.xpose.msra.mxu0 0.0
    %871 = vmatprep.subr.mxu0 0.0
    %872 = vmatpush1.xpose.msra.mxu0 0.0
    %873 = vmatprep.subr.mxu0 0.0
    %874 = vmatpush1.xpose.msra.mxu0 0.0
    %875 = vmatprep.subr.mxu0 0.0
    %876 = vmatpush1.xpose.msra.mxu0 0.0
    %877 = vmatprep.subr.mxu0 0.0
    %878 = vmatpush1.xpose.msra.mxu0 0.0
    %879 = vmatprep.subr.mxu0 0.0
    %880 = vmatpush1.xpose.msra.mxu0 0.0
    %881 = vmatprep.subr.mxu0 0.0
    %882 = vmatpush1.xpose.msra.mxu0 0.0
    %883 = vmatprep.subr.mxu0 0.0
    %884 = vmatpush1.xpose.msra.mxu0 0.0
    %885 = vmatprep.subr.mxu0 0.0
    %886 = vmatpush1.xpose.msra.mxu0 0.0
    %887 = vmatprep.subr.mxu0 0.0
    %888 = vmatpush1.xpose.msra.mxu0 0.0
    %889 = vmatprep.subr.mxu0 0.0
    %890 = vmatpush1.xpose.msra.mxu0 0.0
    %891 = vmatprep.subr.mxu0 0.0
    %892 = vmatpush1.xpose.msra.mxu0 0.0
    %893 = vmatprep.subr.mxu0 0.0
    %894 = vmatpush1.xpose.msra.mxu0 0.0
    %895 = vmatprep.subr.mxu0 0.0
    %896 = vmatpush1.xpose.msra.mxu0 0.0
    %897 = vmatprep.subr.mxu0 0.0
    %898 = vmatpush1.xpose.msra.mxu0 0.0
    %899 = vmatprep.subr.mxu0 0.0
    %900 = vmatpush1.xpose.msra.mxu0 0.0
    %901 = vmatprep.subr.mxu0 0.0
    %902 = vmatpush1.xpose.msra.mxu0 0.0
    %903 = vmatprep.subr.mxu0 0.0
    %904 = vmatpush1.xpose.msra.mxu0 0.0
    %905 = vmatprep.subr.mxu0 0.0
    %906 = vmatpush1.xpose.msra.mxu0 0.0
    %907 = vmatprep.subr.mxu0 0.0
    %908 = vmatpush1.xpose.msra.mxu0 0.0
    %909 = vmatprep.subr.mxu0 0.0
    %910 = vmatpush1.xpose.msra.mxu0 0.0
    %911 = vmatprep.subr.mxu0 0.0
    %912 = vmatpush1.xpose.msra.mxu0 0.0
    %913 = vmatprep.subr.mxu0 0.0
    %914 = vmatpush1.xpose.msra.mxu0 0.0
    %915 = vmatprep.subr.mxu0 0.0
    %916 = vmatpush1.xpose.msra.mxu0 0.0
    %917 = vmatprep.subr.mxu0 0.0
    %918 = vmatpush1.xpose.msra.mxu0 0.0
    %919 = vmatprep.subr.mxu0 0.0
    %920 = vmatpush1.xpose.msra.mxu0 0.0
    %921 = vmatprep.subr.mxu0 0.0
    %922 = vmatpush1.xpose.msra.mxu0 0.0
    %923 = vmatprep.subr.mxu0 0.0
    %924 = vmatpush1.xpose.msra.mxu0 0.0
    %925 = vmatprep.subr.mxu0 0.0
    %926 = vmatpush1.xpose.msra.mxu0 0.0
    %927 = vmatprep.mubr.f32.mxu0 0.0
    %v928 = vand.u32 %v555, 4294901760
    %929 = vmatmul.mubr.f32.gmra.mrb[0].mxu0 %v928
    %v930 = vpop.f32.mrb[0].mxu0
    %v931 = vadd.f32 %v857, %v930
    %v932 = vpop.f32.mrb[0].mxu0
    %933 = vdwg.mxu0
    %934 = vmatprep.subr.mxu0 0.0
    %v935 = vand.u32 %v558, 4294901760
    %936 = vmatpush1.xpose.msra.mxu0 %v935
    %937 = vmatprep.subr.mxu0 0.0
    %938 = vmatpush1.xpose.msra.mxu0 0.0
    %939 = vmatprep.subr.mxu0 0.0
    %940 = vmatpush1.xpose.msra.mxu0 0.0
    %941 = vmatprep.subr.mxu0 0.0
    %942 = vmatpush1.xpose.msra.mxu0 0.0
    %943 = vmatprep.subr.mxu0 0.0
    %944 = vmatpush1.xpose.msra.mxu0 0.0
    %945 = vmatprep.subr.mxu0 0.0
    %946 = vmatpush1.xpose.msra.mxu0 0.0
    %947 = vmatprep.subr.mxu0 0.0
    %948 = vmatpush1.xpose.msra.mxu0 0.0
    %949 = vmatprep.subr.mxu0 0.0
    %950 = vmatpush1.xpose.msra.mxu0 0.0
    %951 = vmatprep.subr.mxu0 0.0
    %952 = vmatpush1.xpose.msra.mxu0 0.0
    %953 = vmatprep.subr.mxu0 0.0
    %954 = vmatpush1.xpose.msra.mxu0 0.0
    %955 = vmatprep.subr.mxu0 0.0
    %956 = vmatpush1.xpose.msra.mxu0 0.0
    %957 = vmatprep.subr.mxu0 0.0
    %958 = vmatpush1.xpose.msra.mxu0 0.0
    %959 = vmatprep.subr.mxu0 0.0
    %960 = vmatpush1.xpose.msra.mxu0 0.0
    %961 = vmatprep.subr.mxu0 0.0
    %962 = vmatpush1.xpose.msra.mxu0 0.0
    %963 = vmatprep.subr.mxu0 0.0
    %964 = vmatpush1.xpose.msra.mxu0 0.0
    %965 = vmatprep.subr.mxu0 0.0
    %966 = vmatpush1.xpose.msra.mxu0 0.0
    %967 = vmatprep.subr.mxu0 0.0
    %968 = vmatpush1.xpose.msra.mxu0 0.0
    %969 = vmatprep.subr.mxu0 0.0
    %970 = vmatpush1.xpose.msra.mxu0 0.0
    %971 = vmatprep.subr.mxu0 0.0
    %972 = vmatpush1.xpose.msra.mxu0 0.0
    %973 = vmatprep.subr.mxu0 0.0
    %974 = vmatpush1.xpose.msra.mxu0 0.0
    %975 = vmatprep.subr.mxu0 0.0
    %976 = vmatpush1.xpose.msra.mxu0 0.0
    %977 = vmatprep.subr.mxu0 0.0
    %978 = vmatpush1.xpose.msra.mxu0 0.0
    %979 = vmatprep.subr.mxu0 0.0
    %980 = vmatpush1.xpose.msra.mxu0 0.0
    %981 = vmatprep.subr.mxu0 0.0
    %982 = vmatpush1.xpose.msra.mxu0 0.0
    %983 = vmatprep.subr.mxu0 0.0
    %984 = vmatpush1.xpose.msra.mxu0 0.0
    %985 = vmatprep.subr.mxu0 0.0
    %986 = vmatpush1.xpose.msra.mxu0 0.0
    %987 = vmatprep.subr.mxu0 0.0
    %988 = vmatpush1.xpose.msra.mxu0 0.0
    %989 = vmatprep.subr.mxu0 0.0
    %990 = vmatpush1.xpose.msra.mxu0 0.0
    %991 = vmatprep.subr.mxu0 0.0
    %992 = vmatpush1.xpose.msra.mxu0 0.0
    %993 = vmatprep.subr.mxu0 0.0
    %994 = vmatpush1.xpose.msra.mxu0 0.0
    %995 = vmatprep.subr.mxu0 0.0
    %996 = vmatpush1.xpose.msra.mxu0 0.0
    %997 = vmatprep.subr.mxu0 0.0
    %998 = vmatpush1.xpose.msra.mxu0 0.0
    %999 = vmatprep.mubr.f32.mxu0 0.0
    %v1000 = vand.u32 %v555, 4294901760
    %1001 = vmatmul.mubr.f32.gmra.mrb[0].mxu0 %v1000
    %v1002 = vpop.f32.mrb[0].mxu0
    %v1003 = vadd.f32 %v931, %v1002
    %v1004 = vpop.f32.mrb[0].mxu0
    %1005 = vdwg.mxu0
    %v1006 = vld [vmem:[#allocation4] sm:$0x1]
    %v1007 = vsel %vm518, %v1003, -inf
    %v1008 = vrot.slane %v1007, 4
    %v1009 = vmax.f32 %v1007, %v1008
    %v1010 = vrot.slane %v1009, 2
    %v1011 = vmax.f32 %v1009, %v1010
    %v1012 = vrot.slane %v1011, 1
    %v1013 = vmax.f32 %v1011, %v1012
    %v1014 = vmax.f32 %v1006, %v1013
    %v1016 = vlaneseq
    %v1017 = vshrl.u32 %v1016, 7
    %v1018 = vsub.s32 0, %v1017
    %v1019 = vrot.slane %v1014, %v1018
    %v1021 = vsub.f32 %v1003, %v1019
    %v1022 = vmul.f32 %v1021, 1.442695
    %v1023 = vpow.pop %v1022
    %v1024 = vsub.f32 %v1006, %v1014
    %v1025 = vmul.f32 %v1024, 1.442695
    %v1026 = vpow.pop %v1025
    %v1027 = vld [vmem:[#allocation5] sm:$0x1]
    %v1028 = vmul.f32 %v1026, %v1027
    %v1029 = vsel %vm518, %v1023, 0.0
    %v1030 = vrot.slane %v1029, 4
    %v1031 = vadd.f32 %v1029, %v1030
    %v1032 = vrot.slane %v1031, 2
    %v1033 = vadd.f32 %v1031, %v1032
    %v1034 = vrot.slane %v1033, 1
    %v1035 = vadd.f32 %v1033, %v1034
    %v1036 = vadd.f32 %v1028, %v1035
    %1037 = vst.msk [vmem:[#allocation5] sm:$0x1] %vm549, %v1036
    %1038 = vst.msk [vmem:[#allocation4] sm:$0x1] %vm549, %v1014
    // Predicated region
    $region34: #{tpu_custom_call.1} parent=1 // pred_check
      %p1039 = pneg %p53
    $region35: #{tpu_custom_call.1} parent=1 // pred_check_branch
      %1041 = sbr.rel (%p1039) target = $region37
    $region36: #{tpu_custom_call.1} parent=1 // pred_region
      %v1042 = vld [vmem:[#allocation2] sm:$0x1]
      %v1043 = vld [vmem:[#allocation3] sm:$0x1]
      %v1044 = vlog2.pop %v1043
      %v1045 = vmul.f32 %v1044, 0.6931472
      %v1046 = vadd.f32 %v1042, %v1045
      %v1047 = vld [vmem:[#allocation4] sm:$0x1]
      %v1048 = vadd.f32 %v1046, %v1047
      %v1049 = vld [vmem:[#allocation5] sm:$0x1]
      %v1050 = vlog2.pop %v1049
      %v1051 = vmul.f32 %v1050, 0.6931472
      %v1052 = vadd.f32 %v1048, %v1051
      %v1054 = vlaneseq
      %v1055 = vshrl.u32 %v1054, 7
      %v1056 = vsub.s32 0, %v1055
      %v1057 = vrot.slane %v1052, %v1056
      %1059 = vst.msk [vmem:[#allocation12] sm:$0xff] %vm518, %v1057
    $region37: #{tpu_custom_call.1} parent=1 // pred_fallthru
      _
    // Predicated region
    $region38: #{tpu_custom_call.1} parent=1 // pred_check
      _
    $region39: #{tpu_custom_call.1} parent=1 // pred_check_branch
      %1061 = sbr.rel (0) target = $region41
    $region40: #{tpu_custom_call.1} parent=1 // pred_region
      %s1063 = ssub.s32 128, 128
      %1064 = vsyncadd [#allocation8], %s1063
      %s1066 = sshll.u32 [#allocation12], 4
      %s1067 = int_to_ptr.vmem [resolvable:$true] %s1066
      %1069 = dma.vmem_to_hbm [thread:$0]  %s1067, 128, %s4, [#allocation8]
    $region41: #{tpu_custom_call.1} parent=1 // pred_fallthru
      _
    // Predicated region
    $region42: #{tpu_custom_call.1} parent=1 // pred_check
      _
    $region43: #{tpu_custom_call.1} parent=1 // pred_check_branch
      %1071 = sbr.rel (0) target = $region45
    $region44: #{tpu_custom_call.1} parent=1 // pred_region
      %1072 = dma.done [#allocation8], 128
    $region45: #{tpu_custom_call.1} parent=1 // pred_fallthru
      _
    %1073 = vsyncpa [#allocation7], 1
    %1074 = vsyncpa [#allocation10], 1
    %1075 = vsyncpa [#allocation8], 1

</llo_original>
